<compile_context>
chip_gen: v7x
topology: tpu7x:2x2x1
jax: 0.10.0
libtpu: 0.0.40
codegen_flags: <defaults>
</compile_context>

<pallas_src>
import math

import jax
import jax.numpy as jnp
from jax import lax
from jax.experimental import pallas as pl
from jax.experimental.pallas import tpu as pltpu

EPS = 1e-5


def _layernorm_kernel(x_ref, g_ref, b_ref, o_ref):
    # x_ref: (tile_rows, dim) in caller dtype; g_ref/b_ref: (1, dim) bf16.
    x = x_ref[...]
    if x.dtype != jnp.bfloat16:
        # Replicate PyTorch: cast to bf16 first, then normalize (f32 stats).
        x = x.astype(jnp.bfloat16)
    xf = x.astype(jnp.float32)

    # Single-pass statistics in f32: mean and E[x^2] over the same tile.
    mean = jnp.mean(xf, axis=-1, keepdims=True)
    mean_sq = jnp.mean(xf * xf, axis=-1, keepdims=True)
    var = jnp.maximum(mean_sq - mean * mean, 0.0)
    inv = lax.rsqrt(var + EPS)           # EUP rsqrt (free slot)

    # Precision-critical subtraction / scale in f32, affine tail in bf16.
    y = ((xf - mean) * inv).astype(jnp.bfloat16)
    o_ref[...] = (y * g_ref[...] + b_ref[...]).astype(o_ref.dtype)


def _round_up(x, m):
    return ((x + m - 1) // m) * m


def _vmem_config():
    """(vmem_budget_bytes for blocks, vmem_limit_bytes for the compiler)."""
    vmem_cap = None
    try:
        get_info = getattr(pltpu, "get_tpu_info", None)
        if get_info is not None:
            info = get_info()
            vmem_cap = getattr(info, "vmem_capacity_bytes", None)
    except Exception:
        vmem_cap = None
    if vmem_cap is None:
        vmem_cap = 64 * 1024 * 1024            # assume tightest (v7x per-TC)
    if vmem_cap >= 96 * 1024 * 1024:           # v5e / v6e: 128 MiB physical
        return 40 * 1024 * 1024, 80 * 1024 * 1024
    return 22 * 1024 * 1024, 48 * 1024 * 1024  # v7x: 64 MiB per TC


def _pick_tile_rows(rows, dim, in_itemsize, vmem_budget_bytes,
                    traffic_target_bytes=16 * 1024 * 1024):
    # VMEM residency per row: double-buffered input + double-buffered bf16
    # output + small slack (f32 temporaries stream through vregs).
    vmem_per_row = dim * (2 * in_itemsize + 2 * 2) + 256
    tr_vmem = vmem_budget_bytes // max(vmem_per_row, 1)
    # Combined in+out HBM traffic per row; target multi-MiB grid steps so the
    # ~0.35 us per-step overhead is amortized.
    traffic_per_row = dim * (in_itemsize + 2)
    tr_traffic = traffic_target_bytes // max(traffic_per_row, 1)

    tr = min(tr_vmem, tr_traffic, _round_up(rows, 16))
    tr = max(16, (tr // 16) * 16)        # bf16 output: 16 sublanes per vreg
    return int(tr)


def layer_norm(x, gamma, beta, *, tile_rows=None):
    """LayerNorm over the last dim. x: (..., dim); gamma/beta: (dim,)."""
    orig_shape = x.shape
    dim = orig_shape[-1]
    rows = int(math.prod(orig_shape[:-1])) if len(orig_shape) > 1 else 1
    x2 = x.reshape(rows, dim)            # metadata-only collapse of leading dims

    vmem_budget, vmem_limit = _vmem_config()
    if tile_rows is None:
        tile_rows = _pick_tile_rows(rows, dim, jnp.dtype(x.dtype).itemsize,
                                    vmem_budget)

    g2 = gamma.reshape(1, dim).astype(jnp.bfloat16)
    b2 = beta.reshape(1, dim).astype(jnp.bfloat16)

    grid = (pl.cdiv(rows, tile_rows),)

    out = pl.pallas_call(
        _layernorm_kernel,
        out_shape=jax.ShapeDtypeStruct((rows, dim), jnp.bfloat16),
        grid_spec=pltpu.PrefetchScalarGridSpec(
            num_scalar_prefetch=0,
            grid=grid,
            in_specs=[
                pl.BlockSpec((tile_rows, dim), lambda i: (i, 0)),
                pl.BlockSpec((1, dim), lambda i: (0, 0)),
                pl.BlockSpec((1, dim), lambda i: (0, 0)),
            ],
            out_specs=pl.BlockSpec((tile_rows, dim), lambda i: (i, 0)),
        ),
        compiler_params=pltpu.CompilerParams(
            dimension_semantics=("parallel",),   # row axis: megacore-shardable
            vmem_limit_bytes=vmem_limit,
        ),
    )(x2, g2, b2)

    return out.reshape(orig_shape)


def _reference(x, gamma, beta):
    xb = x.astype(jnp.bfloat16).astype(jnp.float32)
    mean = jnp.mean(xb, axis=-1, keepdims=True)
    var = jnp.mean((xb - mean) ** 2, axis=-1, keepdims=True)
    return ((xb - mean) * lax.rsqrt(var + EPS)
            * gamma.astype(jnp.float32) + beta.astype(jnp.float32)
            ).astype(jnp.bfloat16)


if __name__ == "__main__":
    key = jax.random.PRNGKey(0)

    # Case 1: module-sized demo (batch=2, seq=8, hidden=32), f32 input.
    batch, seq, dim = 2, 8, 32
    k1, k2 = jax.random.split(key)
    x = jax.random.normal(k1, (batch, seq, dim), dtype=jnp.float32)
    gamma = jnp.ones((dim,), dtype=jnp.bfloat16)
    beta = jnp.zeros((dim,), dtype=jnp.bfloat16)

    y = layer_norm(x, gamma, beta)
    jax.block_until_ready(y)
    ref = _reference(x, gamma, beta)
    assert y.shape == (batch, seq, dim) and y.dtype == jnp.bfloat16
    assert jnp.allclose(y.astype(jnp.float32), ref.astype(jnp.float32),
                        atol=2e-2, rtol=2e-2)

    # Case 2: lane-dense dim (multiple of 128), bf16 input path.
    b2_, s2_, d2_ = 2, 64, 256
    x2 = jax.random.normal(k2, (b2_, s2_, d2_), dtype=jnp.float32
                           ).astype(jnp.bfloat16)
    gamma2 = jnp.ones((d2_,), dtype=jnp.bfloat16)
    beta2 = jnp.zeros((d2_,), dtype=jnp.bfloat16)

    y2 = layer_norm(x2, gamma2, beta2)
    jax.block_until_ready(y2)
    ref2 = _reference(x2, gamma2, beta2)
    assert y2.shape == (b2_, s2_, d2_) and y2.dtype == jnp.bfloat16
    assert jnp.allclose(y2.astype(jnp.float32), ref2.astype(jnp.float32),
                        atol=2e-2, rtol=2e-2)

    print("KERNEL_OK")
</pallas_src>

<mosaic_0001>
module attributes {stable_mosaic.version = 11 : i64} {
  func.func @_layernorm_kernel(%arg0: i32, %arg1: memref<16x32xf32, #tpu.memory_space<vmem>>, %arg2: memref<1x32xbf16, #tpu.memory_space<vmem>>, %arg3: memref<1x32xbf16, #tpu.memory_space<vmem>>, %arg4: memref<16x32xbf16, #tpu.memory_space<vmem>>) attributes {dimension_semantics = [#tpu.dimension_semantics<parallel>], iteration_bounds = array<i64: 1>, scalar_prefetch = 0 : i64, scratch_operands = 0 : i64, tpu.core_type = #tpu.core_type<tc>, window_params = [{transform_indices = @transform_0, window_bounds = array<i64: 16, 32>}, {pipeline_mode = #tpu.pipeline_mode<synchronous>, transform_indices = @transform_1, window_bounds = array<i64: 1, 32>}, {pipeline_mode = #tpu.pipeline_mode<synchronous>, transform_indices = @transform_2, window_bounds = array<i64: 1, 32>}, {transform_indices = @transform_3, window_bounds = array<i64: 16, 32>}]} {
    %c0 = arith.constant 0 : index
    %c0_0 = arith.constant 0 : index
    %0 = vector.load %arg1[%c0, %c0_0] : memref<16x32xf32, #tpu.memory_space<vmem>>, vector<16x32xf32>
    %1 = arith.truncf %0 : vector<16x32xf32> to vector<16x32xbf16>
    %2 = arith.extf %1 : vector<16x32xbf16> to vector<16x32xf32>
    %cst = arith.constant dense<0.000000e+00> : vector<16xf32>
    %3 = vector.multi_reduction <add>, %2, %cst [1] : vector<16x32xf32> to vector<16xf32>
    %4 = vector.shape_cast %3 : vector<16xf32> to vector<16x1xf32>
    %cst_1 = arith.constant 3.200000e+01 : f32
    %5 = vector.broadcast %cst_1 : f32 to vector<16x1xf32>
    %6 = arith.divf %4, %5 : vector<16x1xf32>
    %7 = arith.mulf %2, %2 : vector<16x32xf32>
    %cst_2 = arith.constant dense<0.000000e+00> : vector<16xf32>
    %8 = vector.multi_reduction <add>, %7, %cst_2 [1] : vector<16x32xf32> to vector<16xf32>
    %9 = vector.shape_cast %8 : vector<16xf32> to vector<16x1xf32>
    %cst_3 = arith.constant 3.200000e+01 : f32
    %10 = vector.broadcast %cst_3 : f32 to vector<16x1xf32>
    %11 = arith.divf %9, %10 : vector<16x1xf32>
    %12 = arith.mulf %6, %6 : vector<16x1xf32>
    %13 = arith.subf %11, %12 : vector<16x1xf32>
    %cst_4 = arith.constant 0.000000e+00 : f32
    %14 = vector.broadcast %cst_4 : f32 to vector<16x1xf32>
    %15 = arith.maximumf %13, %14 : vector<16x1xf32>
    %cst_5 = arith.constant 9.99999974E-6 : f32
    %16 = vector.broadcast %cst_5 : f32 to vector<16x1xf32>
    %17 = arith.addf %15, %16 : vector<16x1xf32>
    %18 = math.rsqrt %17 : vector<16x1xf32>
    %19 = vector.broadcast %6 : vector<16x1xf32> to vector<16x32xf32>
    %20 = arith.subf %2, %19 : vector<16x32xf32>
    %21 = vector.broadcast %18 : vector<16x1xf32> to vector<16x32xf32>
    %22 = arith.mulf %20, %21 : vector<16x32xf32>
    %23 = arith.truncf %22 : vector<16x32xf32> to vector<16x32xbf16>
    %c0_6 = arith.constant 0 : index
    %c0_7 = arith.constant 0 : index
    %24 = vector.load %arg2[%c0_6, %c0_7] : memref<1x32xbf16, #tpu.memory_space<vmem>>, vector<1x32xbf16>
    %25 = vector.broadcast %24 : vector<1x32xbf16> to vector<16x32xbf16>
    %26 = arith.mulf %23, %25 : vector<16x32xbf16>
    %c0_8 = arith.constant 0 : index
    %c0_9 = arith.constant 0 : index
    %27 = vector.load %arg3[%c0_8, %c0_9] : memref<1x32xbf16, #tpu.memory_space<vmem>>, vector<1x32xbf16>
    %28 = vector.broadcast %27 : vector<1x32xbf16> to vector<16x32xbf16>
    %29 = arith.addf %26, %28 : vector<16x32xbf16>
    %c0_10 = arith.constant 0 : index
    %c0_11 = arith.constant 0 : index
    %30 = vector.load %arg4[%c0_10, %c0_11] : memref<16x32xbf16, #tpu.memory_space<vmem>>, vector<16x32xbf16>
    tpu.vector_store %arg4[%c0_10, %c0_11], %29 {strides = array<i32>} : memref<16x32xbf16, #tpu.memory_space<vmem>>, vector<16x32xbf16>,
    return
  }
  func.func @transform_0(%arg0: i32) -> (i32, i32) {
    %c0_i32 = arith.constant 0 : i32
    %c0_i32_0 = arith.constant 0 : i32
    return %arg0, %c0_i32 : i32, i32
  }
  func.func @transform_1(%arg0: i32) -> (i32, i32) {
    %c0_i32 = arith.constant 0 : i32
    %c0_i32_0 = arith.constant 0 : i32
    %c0_i32_1 = arith.constant 0 : i32
    return %c0_i32, %c0_i32_0 : i32, i32
  }
  func.func @transform_2(%arg0: i32) -> (i32, i32) {
    %c0_i32 = arith.constant 0 : i32
    %c0_i32_0 = arith.constant 0 : i32
    %c0_i32_1 = arith.constant 0 : i32
    return %c0_i32, %c0_i32_0 : i32, i32
  }
  func.func @transform_3(%arg0: i32) -> (i32, i32) {
    %c0_i32 = arith.constant 0 : i32
    %c0_i32_0 = arith.constant 0 : i32
    return %arg0, %c0_i32 : i32, i32
  }
}

</mosaic_0001>

<llo_original>
// kernel: tpu_custom_call.1
$region0: #{tpu_custom_call.1}
  #allocation0 [shape = 'u32[]', space=smem, size = 0x4, offset = 0x4, fixed_abs, tag = 'smem constant byte address 0x4 - core index']
  #allocation1 [shape = 'u32[144,128]{1,0:T(1,128)}', space=vmem, size = 0x12000, scoped, tag = 'internal scratch']
  %s0 = inlined_call_operand.hbm [shape: f32[16,32], index: 0, kind: input, shape index: {}]
  %s1 = inlined_call_operand.vmem [shape: bf16[1,32], index: 1, kind: input, shape index: {}]
  %s2 = inlined_call_operand.vmem [shape: bf16[1,32], index: 2, kind: input, shape index: {}]
  %s3 = inlined_call_operand.hbm [shape: bf16[16,32], index: 3, kind: output, shape index: {}]
  %s4 = sld [smem:[#allocation0]]
  $region26: #{tpu_custom_call.1} parent=0
    _
  %s6 = ssub.s32 1, %s4
  %s7 = scalar_select 0, %s6, %s4
  $region1: #{tpu_custom_call.1} parent=0
    #allocation2 [shape = 'u8[8192]{0}', space=vmem, size = 0x2000, scoped, tag = 'input window, operand 0, single buffered']
    #allocation3 [shape = 's32[1]{0}', space=sflag, size = 0x4, scoped, tag = 'scoped memory for tpu_custom_call.1']
    #allocation4 [shape = 's32[1]{0}', space=sflag, size = 0x4, scoped, tag = 'scoped memory for tpu_custom_call.1']
    #allocation5 [shape = 'u8[4096]{0}', space=vmem, size = 0x1000, scoped, tag = 'output window, operand 0, single buffered']
    %8 = vsyncpa [#allocation3], 0
    %9 = vsyncpa [#allocation4], 0
    // Predicated region
    $region2: #{tpu_custom_call.1} parent=1 // pred_check
      _
    $region3: #{tpu_custom_call.1} parent=1 // pred_check_branch
      %11 = sbr.rel (0) target = $region5
    $region4: #{tpu_custom_call.1} parent=1 // pred_region
      %s13 = ssub.s32 256, 256
      %14 = vsyncadd [#allocation3], %s13
      %s15 = sshll.u32 [#allocation2], 4
      %s16 = int_to_ptr.vmem [resolvable:$true] %s15
      %21 = dma.hbm_to_vmem [thread:$0]  %s0, 256, %s16, [#allocation3], 128, 128, 8
    $region5: #{tpu_custom_call.1} parent=1 // pred_fallthru
      _
    // Predicated region
    $region6: #{tpu_custom_call.1} parent=1 // pred_check
      _
    $region7: #{tpu_custom_call.1} parent=1 // pred_check_branch
      %23 = sbr.rel (0) target = $region9
    $region8: #{tpu_custom_call.1} parent=1 // pred_region
      _
    $region9: #{tpu_custom_call.1} parent=1 // pred_fallthru
      _
    // Predicated region
    $region10: #{tpu_custom_call.1} parent=1 // pred_check
      _
    $region11: #{tpu_custom_call.1} parent=1 // pred_check_branch
      %25 = sbr.rel (0) target = $region13
    $region12: #{tpu_custom_call.1} parent=1 // pred_region
      _
    $region13: #{tpu_custom_call.1} parent=1 // pred_fallthru
      _
    // Predicated region
    $region14: #{tpu_custom_call.1} parent=1 // pred_check
      _
    $region15: #{tpu_custom_call.1} parent=1 // pred_check_branch
      %27 = sbr.rel (0) target = $region17
    $region16: #{tpu_custom_call.1} parent=1 // pred_region
      %28 = dma.done [#allocation3], 256
    $region17: #{tpu_custom_call.1} parent=1 // pred_fallthru
      _
    %v29 = vld [vmem:[#allocation2] sm:$0xff]
    %v30 = vld [vmem:[#allocation2 + $0x8] sm:$0xff]
    %v31 = vpack.c.bf16 %v30, %v29
    %v32 = vunpack.c.l.bf16 %v31
    %v33 = vunpack.c.h.bf16 %v31
    %vm34 = vcmask 261120
    %v35 = vsel %vm34, %v32, 0.0
    %36 = vadd.xlane.f32.xlu0 %v35
    %v37 = vpop.xlane.xlu0 %36
    %v38 = vsel %vm34, %v33, 0.0
    %39 = vadd.xlane.f32.xlu0 %v38
    %v40 = vpop.xlane.xlu0 %39
    %v41 = vrcp.pop 32.0
    %v42 = vmul.f32 %v37, %v41
    %v43 = vmul.f32 %v40, %v41
    %v44 = vmul.f32 %v32, %v32
    %v45 = vmul.f32 %v33, %v33
    %v46 = vsel %vm34, %v44, 0.0
    %47 = vadd.xlane.f32.xlu0 %v46
    %v48 = vpop.xlane.xlu0 %47
    %v49 = vsel %vm34, %v45, 0.0
    %50 = vadd.xlane.f32.xlu0 %v49
    %v51 = vpop.xlane.xlu0 %50
    %v52 = vmul.f32 %v48, %v41
    %v53 = vmul.f32 %v51, %v41
    %v54 = vmul.f32 %v42, %v42
    %v55 = vmul.f32 %v43, %v43
    %v56 = vsub.f32 %v52, %v54
    %v57 = vsub.f32 %v53, %v55
    %v58 = vmax.f32 %v56, 0.0
    %v59 = vmax.f32 %v57, 0.0
    %v60 = vadd.f32 %v58, 1e-05
    %v61 = vadd.f32 %v59, 1e-05
    %v62 = vrsqrt.pop %v60
    %v63 = vrsqrt.pop %v61
    %v64 = vsub.f32 %v32, %v42
    %v65 = vsub.f32 %v33, %v43
    %v66 = vmul.f32 %v64, %v62
    %v67 = vmul.f32 %v65, %v63
    %v68 = vpack.c.bf16 %v67, %v66
    %v69 = vld [vmem:[%s1] sm:$0x1]
    %v71 = vpack.i.b16 %v69, %v69
    %v73 = vlaneseq
    %v74 = vshrl.u32 %v73, 7
    %v75 = vsub.s32 0, %v74
    %v76 = vrot.slane %v71, %v75
    %v77 = vmul.bf16 %v68, %v76
    %v78 = vld [vmem:[%s2] sm:$0x1]
    %v80 = vpack.i.b16 %v78, %v78
    %v82 = vlaneseq
    %v83 = vshrl.u32 %v82, 7
    %v84 = vsub.s32 0, %v83
    %v85 = vrot.slane %v80, %v84
    %v86 = vadd.bf16 %v77, %v85
    %v88 = vunpack.c.l.b16 %v86
    %v89 = vunpack.c.h.b16 %v86
    %v90 = vpack.c.b16 %v88, %v88
    %v91 = vpack.c.b16 %v89, %v89
    %vm94 = vcmask 257024
    %95 = vst.msk [vmem:[#allocation5] sm:$0xf] %vm94, %v90
    %96 = vst.msk [vmem:[#allocation5 + $0x4] sm:$0xf] %vm94, %v91
    // Predicated region
    $region18: #{tpu_custom_call.1} parent=1 // pred_check
      _
    $region19: #{tpu_custom_call.1} parent=1 // pred_check_branch
      %98 = sbr.rel (0) target = $region21
    $region20: #{tpu_custom_call.1} parent=1 // pred_region
      %s100 = ssub.s32 128, 128
      %101 = vsyncadd [#allocation4], %s100
      %s102 = sshll.u32 [#allocation5], 4
      %s103 = int_to_ptr.vmem [resolvable:$true] %s102
      %108 = dma.vmem_to_hbm [thread:$0]  %s103, 128, %s3, [#allocation4], 64, 64, 4
    $region21: #{tpu_custom_call.1} parent=1 // pred_fallthru
      _
    // Predicated region
    $region22: #{tpu_custom_call.1} parent=1 // pred_check
      _
    $region23: #{tpu_custom_call.1} parent=1 // pred_check_branch
      %110 = sbr.rel (0) target = $region25
    $region24: #{tpu_custom_call.1} parent=1 // pred_region
      %111 = dma.done [#allocation4], 128
    $region25: #{tpu_custom_call.1} parent=1 // pred_fallthru
      _
    %112 = vsyncpa [#allocation3], 1
    %113 = vsyncpa [#allocation4], 1

</llo_original>
